<compile_context>
chip_gen: v6e
topology: v6e:2x2x1
jax: 0.10.0
libtpu: 0.0.40
codegen_flags: <defaults>
</compile_context>

<pallas_src>
import functools

import jax
import jax.numpy as jnp
from jax import lax
from jax.experimental import pallas as pl
from jax.experimental.pallas import tpu as pltpu

EPS = 1e-5  # PyTorch BatchNorm2d default eps


# ----------------------------- Pallas kernel --------------------------------
def _inverted_residual_kernel(x_ref, w1_ref, b1_ref, wdw_ref, w3_ref, b3_ref,
                              o_ref, *, W, L):
    # x: (C, L) with L = Nb*H*W, lane-dense.
    x = x_ref[...].astype(jnp.float32)

    # --- branch2: 1x1 conv (BN1 scale folded into weights) + bias + ReLU ---
    t1 = jnp.dot(w1_ref[...], x, preferred_element_type=jnp.float32)
    t1 = jnp.maximum(t1 + b1_ref[...], 0.0)

    # --- branch2: depthwise 3x3, stride 1, pad 1 ---
    # Each tap is one static XLU lane rotation of t1 times a host-precomputed
    # border-masked per-channel weight plane: one mul + one add per tap.
    # BN2 is already folded into the second 1x1 conv.
    acc = t1 * wdw_ref[4]                                   # center tap
    for k in range(9):
        if k == 4:
            continue
        oy, ox = k // 3 - 1, k % 3 - 1
        shift = (-(oy * W + ox)) % L                        # static rotation
        acc = acc + pltpu.roll(t1, shift=shift, axis=1) * wdw_ref[k]

    # --- branch2: 1x1 conv (BN2 & BN3 folded into weights/bias) + ReLU ---
    t3 = jnp.dot(w3_ref[...], acc, preferred_element_type=jnp.float32)
    t3 = jnp.maximum(t3 + b3_ref[...], 0.0)

    # --- residual add (use_add=True, stride=1 path) ---
    o_ref[...] = (x + t3).astype(o_ref.dtype)


# ------------------------------- Wrapper -------------------------------------
def inverted_residual_shufflenetv2(x_nchw, kp):
    """x_nchw: (N, C, H, W) PyTorch layout; kp: see pack_kernel_params."""
    N, C, H, W = x_nchw.shape
    Cb = kp["w1"].shape[0]
    assert C == Cb, "stride=1 / use_add=True requires inp == oup // 2"
    HW = H * W

    # Pick a per-step image batch Nb (divisor of N) so that the double-buffered
    # in/out tiles plus the 9-tap table fit the smallest scoped-VMEM default
    # (v5e: 16 MiB).  (2 in + 2 out + 9 tap planes) * Nb * C * HW * 4 bytes.
    budget = 12 * 1024 * 1024
    per_img = (4 + 9) * C * HW * 4
    nb_cap = max(1, budget // per_img)
    Nb = 1
    for d in range(1, N + 1):
        if N % d == 0 and d <= nb_cap:
            Nb = d
    if Nb < N and (Nb * HW) % 128 != 0:
        Nb = N                       # fall back to a single whole-array step
    L = Nb * HW
    grid_len = N // Nb
    # TODO(synk): on v7x, prefer an even grid_len >= 2 so both TensorCores get
    # balanced work once N is large; at the demo size a single step is optimal.

    # Channels-major lane-dense layout: one cheap transpose, then free reshapes.
    x_cl = jnp.transpose(x_nchw.reshape(N, C, HW), (1, 0, 2)).reshape(C, N * HW)
    # Tile the per-image masked tap table across the Nb images in one step.
    wdw_masked = jnp.tile(kp["wdw_masked"], (1, 1, Nb))     # (9, C, L)

    kernel = functools.partial(_inverted_residual_kernel, W=W, L=L)

    def full(arr):
        nd = arr.ndim
        return pl.BlockSpec(arr.shape, lambda i, _nd=nd: (0,) * _nd)

    flops = N * HW * (2 * 2 * Cb * Cb + 2 * 9 * Cb + 4 * Cb)
    bytes_accessed = 4 * (2 * N * Cb * HW + 9 * Cb * L + 2 * Cb * Cb + 2 * Cb)
    cost = pl.CostEstimate(flops=flops, transcendentals=0,
                           bytes_accessed=bytes_accessed)

    out_cl = pl.pallas_call(
        kernel,
        out_shape=jax.ShapeDtypeStruct((C, N * HW), x_nchw.dtype),
        grid_spec=pltpu.PrefetchScalarGridSpec(
            num_scalar_prefetch=0,
            grid=(grid_len,),
            in_specs=[
                pl.BlockSpec((C, L), lambda i: (0, i)),
                full(kp["w1"]), full(kp["b1"]),
                full(wdw_masked),
                full(kp["w3"]), full(kp["b3"]),
            ],
            out_specs=pl.BlockSpec((C, L), lambda i: (0, i)),
        ),
        compiler_params=pltpu.CompilerParams(
            dimension_semantics=("parallel",)),
        cost_estimate=cost,
    )(x_cl, kp["w1"], kp["b1"], wdw_masked, kp["w3"], kp["b3"])

    return jnp.transpose(out_cl.reshape(C, N, HW), (1, 0, 2)).reshape(N, C, H, W)


# ----------------------- Deterministic parameter setup -----------------------
def init_torch_params(key, inp, oup):
    """Parameters in PyTorch layouts (OIHW conv weights, BN vectors)."""
    Cb = oup // 2
    ks = iter(jax.random.split(key, 20))

    def conv(shape, scale=0.3):
        return scale * jax.random.normal(next(ks), shape, jnp.float32)

    def bn(c):
        return dict(
            gamma=1.0 + 0.2 * jax.random.normal(next(ks), (c,), jnp.float32),
            beta=0.1 * jax.random.normal(next(ks), (c,), jnp.float32),
            mean=0.1 * jax.random.normal(next(ks), (c,), jnp.float32),
            var=0.5 + jax.random.uniform(next(ks), (c,), jnp.float32),
        )

    return dict(
        w1=conv((Cb, inp, 1, 1)), bn1=bn(Cb),     # branch2[0], branch2[1]
        wdw=conv((Cb, 1, 3, 3)),  bn2=bn(Cb),     # branch2[3], branch2[4]
        w3=conv((Cb, Cb, 1, 1)),  bn3=bn(Cb),     # branch2[5], branch2[6]
    )


def _fold_bn(p):
    scale = p["gamma"] / jnp.sqrt(p["var"] + EPS)
    bias = p["beta"] - p["mean"] * scale
    return scale, bias


def pack_kernel_params(tp, H, W):
    """PyTorch-layout params -> kernel layouts with all BN scales folded."""
    Cb = tp["w1"].shape[0]
    s1, b1 = _fold_bn(tp["bn1"])
    s2, b2 = _fold_bn(tp["bn2"])
    s3, b3 = _fold_bn(tp["bn3"])

    w1 = tp["w1"][:, :, 0, 0]                          # (Cb, Cin)
    w3 = tp["w3"][:, :, 0, 0]                          # (Cb, Cb)
    # Fold BN1 scale into conv1; BN2 and BN3 fully into conv3.
    w1f = s1[:, None] * w1
    b1f = b1.reshape(Cb, 1)
    w3f = s3[:, None] * w3 * s2[None, :]
    b3f = (s3 * (w3 @ b2) + b3).reshape(Cb, 1)

    # Per-tap, border-masked depthwise weight planes (periodic per image).
    wdw = tp["wdw"][:, 0, :, :].reshape(Cb, 9)         # (Cb, ky*kx)
    hh = jnp.arange(H * W) // W
    ww = jnp.arange(H * W) % W
    taps = []
    for k in range(9):
        oy, ox = k // 3 - 1, k % 3 - 1
        valid = ((hh + oy >= 0) & (hh + oy < H) &
                 (ww + ox >= 0) & (ww + ox < W)).astype(jnp.float32)
        taps.append(valid[None, :] * wdw[:, k][:, None])   # (Cb, HW)
    wdw_masked = jnp.stack(taps, axis=0)               # (9, Cb, HW)

    return dict(w1=w1f, b1=b1f, wdw_masked=wdw_masked, w3=w3f, b3=b3f)


# --------------------------- Pure-JAX reference -------------------------------
def ref_forward(x, tp):
    def bn(y, p):
        sh = (1, -1, 1, 1)
        return ((y - p["mean"].reshape(sh)) / jnp.sqrt(p["var"].reshape(sh) + EPS)
                * p["gamma"].reshape(sh) + p["beta"].reshape(sh))

    dn = ("NCHW", "OIHW", "NCHW")
    hp = lax.Precision.HIGHEST
    Cb = tp["w1"].shape[0]
    t = lax.conv_general_dilated(x, tp["w1"], (1, 1), "VALID",
                                 dimension_numbers=dn, precision=hp)
    t = jax.nn.relu(bn(t, tp["bn1"]))
    t = lax.conv_general_dilated(t, tp["wdw"], (1, 1), ((1, 1), (1, 1)),
                                 dimension_numbers=dn, feature_group_count=Cb,
                                 precision=hp)
    t = bn(t, tp["bn2"])
    t = lax.conv_general_dilated(t, tp["w3"], (1, 1), "VALID",
                                 dimension_numbers=dn, precision=hp)
    t = jax.nn.relu(bn(t, tp["bn3"]))
    return x + t  # use_add=True, stride=1


# ---------------------------------- Main --------------------------------------
if __name__ == "__main__":
    inp, oup = 8, 16          # stride=1 + use_add  =>  inp == oup // 2
    N, H, W = 2, 16, 16

    key = jax.random.PRNGKey(0)
    kx, kparam = jax.random.split(key)
    x = jax.random.normal(kx, (N, inp, H, W), jnp.float32)

    torch_params = init_torch_params(kparam, inp, oup)
    kernel_params = pack_kernel_params(torch_params, H, W)

    out = jax.block_until_ready(inverted_residual_shufflenetv2(x, kernel_params))
    ref = ref_forward(x, torch_params)

    assert out.shape == ref.shape == (N, oup // 2, H, W), (out.shape, ref.shape)
    max_err = float(jnp.max(jnp.abs(out - ref)))
    if not bool(jnp.allclose(out, ref, atol=1e-2, rtol=1e-2)):
        raise AssertionError(f"kernel/reference mismatch, max abs err = {max_err}")
    print("KERNEL_OK")
</pallas_src>

<mosaic_0001>
module attributes {stable_mosaic.version = 11 : i64} {
  func.func @_inverted_residual_kernel(%arg0: i32, %arg1: memref<8x512xf32, #tpu.memory_space<vmem>>, %arg2: memref<8x8xf32, #tpu.memory_space<vmem>>, %arg3: memref<8x1xf32, #tpu.memory_space<vmem>>, %arg4: memref<9x8x512xf32, #tpu.memory_space<vmem>>, %arg5: memref<8x8xf32, #tpu.memory_space<vmem>>, %arg6: memref<8x1xf32, #tpu.memory_space<vmem>>, %arg7: memref<8x512xf32, #tpu.memory_space<vmem>>) attributes {dimension_semantics = [#tpu.dimension_semantics<parallel>], iteration_bounds = array<i64: 1>, scalar_prefetch = 0 : i64, scratch_operands = 0 : i64, tpu.core_type = #tpu.core_type<tc>, window_params = [{transform_indices = @transform_0, window_bounds = array<i64: 8, 512>}, {pipeline_mode = #tpu.pipeline_mode<synchronous>, transform_indices = @transform_1, window_bounds = array<i64: 8, 8>}, {pipeline_mode = #tpu.pipeline_mode<synchronous>, transform_indices = @transform_2, window_bounds = array<i64: 8, 1>}, {pipeline_mode = #tpu.pipeline_mode<synchronous>, transform_indices = @transform_3, window_bounds = array<i64: 9, 8, 512>}, {pipeline_mode = #tpu.pipeline_mode<synchronous>, transform_indices = @transform_4, window_bounds = array<i64: 8, 8>}, {pipeline_mode = #tpu.pipeline_mode<synchronous>, transform_indices = @transform_5, window_bounds = array<i64: 8, 1>}, {transform_indices = @transform_6, window_bounds = array<i64: 8, 512>}]} {
    %c0 = arith.constant 0 : index
    %c0_0 = arith.constant 0 : index
    %0 = vector.load %arg1[%c0, %c0_0] : memref<8x512xf32, #tpu.memory_space<vmem>>, vector<8x512xf32>
    %c0_1 = arith.constant 0 : index
    %c0_2 = arith.constant 0 : index
    %1 = vector.load %arg2[%c0_1, %c0_2] : memref<8x8xf32, #tpu.memory_space<vmem>>, vector<8x8xf32>
    %cst = arith.constant dense<0.000000e+00> : vector<8x512xf32>
    %2 = tpu.matmul %1, %0, %cst {dimension_numbers = #tpu.dot_dimension_numbers<[1], [0], [0], [1], [0, 0, 1, 1], [], []>} : vector<8x8xf32>, vector<8x512xf32>, vector<8x512xf32> -> vector<8x512xf32>
    %c0_3 = arith.constant 0 : index
    %c0_4 = arith.constant 0 : index
    %3 = vector.load %arg3[%c0_3, %c0_4] : memref<8x1xf32, #tpu.memory_space<vmem>>, vector<8x1xf32>
    %4 = vector.broadcast %3 : vector<8x1xf32> to vector<8x512xf32>
    %5 = arith.addf %2, %4 : vector<8x512xf32>
    %cst_5 = arith.constant 0.000000e+00 : f32
    %6 = vector.broadcast %cst_5 : f32 to vector<8x512xf32>
    %7 = arith.maximumf %5, %6 : vector<8x512xf32>
    %c4 = arith.constant 4 : index
    %c0_6 = arith.constant 0 : index
    %c0_7 = arith.constant 0 : index
    %8 = vector.load %arg4[%c4, %c0_6, %c0_7] : memref<9x8x512xf32, #tpu.memory_space<vmem>>, vector<1x8x512xf32>
    %9 = vector.shape_cast %8 : vector<1x8x512xf32> to vector<8x512xf32>
    %10 = arith.mulf %7, %9 : vector<8x512xf32>
    %c17_i32 = arith.constant 17 : i32
    %11 = tpu.dynamic_rotate %7 by %c17_i32 dim 1 : vector<8x512xf32>, i32 -> vector<8x512xf32>
    %c0_8 = arith.constant 0 : index
    %c0_9 = arith.constant 0 : index
    %c0_10 = arith.constant 0 : index
    %12 = vector.load %arg4[%c0_8, %c0_9, %c0_10] : memref<9x8x512xf32, #tpu.memory_space<vmem>>, vector<1x8x512xf32>
    %13 = vector.shape_cast %12 : vector<1x8x512xf32> to vector<8x512xf32>
    %14 = arith.mulf %11, %13 : vector<8x512xf32>
    %15 = arith.addf %10, %14 : vector<8x512xf32>
    %c16_i32 = arith.constant 16 : i32
    %16 = tpu.dynamic_rotate %7 by %c16_i32 dim 1 : vector<8x512xf32>, i32 -> vector<8x512xf32>
    %c1 = arith.constant 1 : index
    %c0_11 = arith.constant 0 : index
    %c0_12 = arith.constant 0 : index
    %17 = vector.load %arg4[%c1, %c0_11, %c0_12] : memref<9x8x512xf32, #tpu.memory_space<vmem>>, vector<1x8x512xf32>
    %18 = vector.shape_cast %17 : vector<1x8x512xf32> to vector<8x512xf32>
    %19 = arith.mulf %16, %18 : vector<8x512xf32>
    %20 = arith.addf %15, %19 : vector<8x512xf32>
    %c15_i32 = arith.constant 15 : i32
    %21 = tpu.dynamic_rotate %7 by %c15_i32 dim 1 : vector<8x512xf32>, i32 -> vector<8x512xf32>
    %c2 = arith.constant 2 : index
    %c0_13 = arith.constant 0 : index
    %c0_14 = arith.constant 0 : index
    %22 = vector.load %arg4[%c2, %c0_13, %c0_14] : memref<9x8x512xf32, #tpu.memory_space<vmem>>, vector<1x8x512xf32>
    %23 = vector.shape_cast %22 : vector<1x8x512xf32> to vector<8x512xf32>
    %24 = arith.mulf %21, %23 : vector<8x512xf32>
    %25 = arith.addf %20, %24 : vector<8x512xf32>
    %c1_i32 = arith.constant 1 : i32
    %26 = tpu.dynamic_rotate %7 by %c1_i32 dim 1 : vector<8x512xf32>, i32 -> vector<8x512xf32>
    %c3 = arith.constant 3 : index
    %c0_15 = arith.constant 0 : index
    %c0_16 = arith.constant 0 : index
    %27 = vector.load %arg4[%c3, %c0_15, %c0_16] : memref<9x8x512xf32, #tpu.memory_space<vmem>>, vector<1x8x512xf32>
    %28 = vector.shape_cast %27 : vector<1x8x512xf32> to vector<8x512xf32>
    %29 = arith.mulf %26, %28 : vector<8x512xf32>
    %30 = arith.addf %25, %29 : vector<8x512xf32>
    %c511_i32 = arith.constant 511 : i32
    %31 = tpu.dynamic_rotate %7 by %c511_i32 dim 1 : vector<8x512xf32>, i32 -> vector<8x512xf32>
    %c5 = arith.constant 5 : index
    %c0_17 = arith.constant 0 : index
    %c0_18 = arith.constant 0 : index
    %32 = vector.load %arg4[%c5, %c0_17, %c0_18] : memref<9x8x512xf32, #tpu.memory_space<vmem>>, vector<1x8x512xf32>
    %33 = vector.shape_cast %32 : vector<1x8x512xf32> to vector<8x512xf32>
    %34 = arith.mulf %31, %33 : vector<8x512xf32>
    %35 = arith.addf %30, %34 : vector<8x512xf32>
    %c497_i32 = arith.constant 497 : i32
    %36 = tpu.dynamic_rotate %7 by %c497_i32 dim 1 : vector<8x512xf32>, i32 -> vector<8x512xf32>
    %c6 = arith.constant 6 : index
    %c0_19 = arith.constant 0 : index
    %c0_20 = arith.constant 0 : index
    %37 = vector.load %arg4[%c6, %c0_19, %c0_20] : memref<9x8x512xf32, #tpu.memory_space<vmem>>, vector<1x8x512xf32>
    %38 = vector.shape_cast %37 : vector<1x8x512xf32> to vector<8x512xf32>
    %39 = arith.mulf %36, %38 : vector<8x512xf32>
    %40 = arith.addf %35, %39 : vector<8x512xf32>
    %c496_i32 = arith.constant 496 : i32
    %41 = tpu.dynamic_rotate %7 by %c496_i32 dim 1 : vector<8x512xf32>, i32 -> vector<8x512xf32>
    %c7 = arith.constant 7 : index
    %c0_21 = arith.constant 0 : index
    %c0_22 = arith.constant 0 : index
    %42 = vector.load %arg4[%c7, %c0_21, %c0_22] : memref<9x8x512xf32, #tpu.memory_space<vmem>>, vector<1x8x512xf32>
    %43 = vector.shape_cast %42 : vector<1x8x512xf32> to vector<8x512xf32>
    %44 = arith.mulf %41, %43 : vector<8x512xf32>
    %45 = arith.addf %40, %44 : vector<8x512xf32>
    %c495_i32 = arith.constant 495 : i32
    %46 = tpu.dynamic_rotate %7 by %c495_i32 dim 1 : vector<8x512xf32>, i32 -> vector<8x512xf32>
    %c8 = arith.constant 8 : index
    %c0_23 = arith.constant 0 : index
    %c0_24 = arith.constant 0 : index
    %47 = vector.load %arg4[%c8, %c0_23, %c0_24] : memref<9x8x512xf32, #tpu.memory_space<vmem>>, vector<1x8x512xf32>
    %48 = vector.shape_cast %47 : vector<1x8x512xf32> to vector<8x512xf32>
    %49 = arith.mulf %46, %48 : vector<8x512xf32>
    %50 = arith.addf %45, %49 : vector<8x512xf32>
    %c0_25 = arith.constant 0 : index
    %c0_26 = arith.constant 0 : index
    %51 = vector.load %arg5[%c0_25, %c0_26] : memref<8x8xf32, #tpu.memory_space<vmem>>, vector<8x8xf32>
    %cst_27 = arith.constant dense<0.000000e+00> : vector<8x512xf32>
    %52 = tpu.matmul %51, %50, %cst_27 {dimension_numbers = #tpu.dot_dimension_numbers<[1], [0], [0], [1], [0, 0, 1, 1], [], []>} : vector<8x8xf32>, vector<8x512xf32>, vector<8x512xf32> -> vector<8x512xf32>
    %c0_28 = arith.constant 0 : index
    %c0_29 = arith.constant 0 : index
    %53 = vector.load %arg6[%c0_28, %c0_29] : memref<8x1xf32, #tpu.memory_space<vmem>>, vector<8x1xf32>
    %54 = vector.broadcast %53 : vector<8x1xf32> to vector<8x512xf32>
    %55 = arith.addf %52, %54 : vector<8x512xf32>
    %cst_30 = arith.constant 0.000000e+00 : f32
    %56 = vector.broadcast %cst_30 : f32 to vector<8x512xf32>
    %57 = arith.maximumf %55, %56 : vector<8x512xf32>
    %58 = arith.addf %0, %57 : vector<8x512xf32>
    %c0_31 = arith.constant 0 : index
    %c0_32 = arith.constant 0 : index
    %59 = vector.load %arg7[%c0_31, %c0_32] : memref<8x512xf32, #tpu.memory_space<vmem>>, vector<8x512xf32>
    tpu.vector_store %arg7[%c0_31, %c0_32], %58 {strides = array<i32>} : memref<8x512xf32, #tpu.memory_space<vmem>>, vector<8x512xf32>,
    return
  }
  func.func @transform_0(%arg0: i32) -> (i32, i32) {
    %c0_i32 = arith.constant 0 : i32
    %c0_i32_0 = arith.constant 0 : i32
    return %c0_i32, %arg0 : i32, i32
  }
  func.func @transform_1(%arg0: i32) -> (i32, i32) {
    %c0_i32 = arith.constant 0 : i32
    %c0_i32_0 = arith.constant 0 : i32
    %c0_i32_1 = arith.constant 0 : i32
    return %c0_i32, %c0_i32_0 : i32, i32
  }
  func.func @transform_2(%arg0: i32) -> (i32, i32) {
    %c0_i32 = arith.constant 0 : i32
    %c0_i32_0 = arith.constant 0 : i32
    %c0_i32_1 = arith.constant 0 : i32
    return %c0_i32, %c0_i32_0 : i32, i32
  }
  func.func @transform_3(%arg0: i32) -> (i32, i32, i32) {
    %c0_i32 = arith.constant 0 : i32
    %c0_i32_0 = arith.constant 0 : i32
    %c0_i32_1 = arith.constant 0 : i32
    %c0_i32_2 = arith.constant 0 : i32
    return %c0_i32, %c0_i32_0, %c0_i32_1 : i32, i32, i32
  }
  func.func @transform_4(%arg0: i32) -> (i32, i32) {
    %c0_i32 = arith.constant 0 : i32
    %c0_i32_0 = arith.constant 0 : i32
    %c0_i32_1 = arith.constant 0 : i32
    return %c0_i32, %c0_i32_0 : i32, i32
  }
  func.func @transform_5(%arg0: i32) -> (i32, i32) {
    %c0_i32 = arith.constant 0 : i32
    %c0_i32_0 = arith.constant 0 : i32
    %c0_i32_1 = arith.constant 0 : i32
    return %c0_i32, %c0_i32_0 : i32, i32
  }
  func.func @transform_6(%arg0: i32) -> (i32, i32) {
    %c0_i32 = arith.constant 0 : i32
    %c0_i32_0 = arith.constant 0 : i32
    return %c0_i32, %arg0 : i32, i32
  }
}

</mosaic_0001>

<llo_original>
// kernel: tpu_custom_call.1
$region0: #{tpu_custom_call.1}
  #allocation0 [shape = 'u32[]', space=smem, size = 0x4, offset = 0x4, fixed_abs, tag = 'smem constant byte address 0x4 - core index']
  #allocation1 [shape = 'u32[144,128]{1,0:T(1,128)}', space=vmem, size = 0x12000, scoped, tag = 'internal scratch']
  %s0 = inlined_call_operand.hbm [shape: f32[8,512], index: 0, kind: input, shape index: {}]
  %s1 = inlined_call_operand.vmem [shape: f32[8,8], index: 1, kind: input, shape index: {}]
  %s2 = inlined_call_operand.vmem [shape: f32[8,1], index: 2, kind: input, shape index: {}]
  %s3 = inlined_call_operand.hbm [shape: f32[9,8,512], index: 3, kind: input, shape index: {}]
  %s4 = inlined_call_operand.vmem [shape: f32[8,8], index: 4, kind: input, shape index: {}]
  %s5 = inlined_call_operand.vmem [shape: f32[8,1], index: 5, kind: input, shape index: {}]
  %s6 = inlined_call_operand.hbm [shape: f32[8,512], index: 6, kind: output, shape index: {}]
  %s7 = sld [smem:[#allocation0]]
  $region42: #{tpu_custom_call.1} parent=0
    _
  %s9 = ssub.s32 1, %s7
  %s10 = scalar_select 0, %s9, %s7
  $region1: #{tpu_custom_call.1} parent=0
    #allocation2 [shape = 'u8[16384]{0}', space=vmem, size = 0x4000, scoped, tag = 'input window, operand 0, single buffered']
    #allocation3 [shape = 's32[1]{0}', space=sflag, size = 0x4, scoped, tag = 'scoped memory for tpu_custom_call.1']
    #allocation4 [shape = 's32[1]{0}', space=sflag, size = 0x4, scoped, tag = 'scoped memory for tpu_custom_call.1']
    #allocation5 [shape = 'u8[147456]{0}', space=vmem, size = 0x24000, scoped, tag = 'input window, operand 3, single buffered']
    #allocation6 [shape = 's32[1]{0}', space=sflag, size = 0x4, scoped, tag = 'scoped memory for tpu_custom_call.1']
    #allocation7 [shape = 'u8[16384]{0}', space=vmem, size = 0x4000, scoped, tag = 'output window, operand 0, single buffered']
    %11 = vsyncpa [#allocation3], 0
    %12 = vsyncpa [#allocation6], 0
    %13 = vsyncpa [#allocation4], 0
    // Predicated region
    $region2: #{tpu_custom_call.1} parent=1 // pred_check
      _
    $region3: #{tpu_custom_call.1} parent=1 // pred_check_branch
      %15 = sbr.rel (0) target = $region5
    $region4: #{tpu_custom_call.1} parent=1 // pred_region
      %s17 = ssub.s32 512, 512
      %18 = vsyncadd [#allocation3], %s17
      %s20 = sshll.u32 [#allocation2], 4
      %s21 = int_to_ptr.vmem [resolvable:$true] %s20
      %23 = dma.hbm_to_vmem [thread:$0]  %s0, 512, %s21, [#allocation3]
    $region5: #{tpu_custom_call.1} parent=1 // pred_fallthru
      _
    // Predicated region
    $region6: #{tpu_custom_call.1} parent=1 // pred_check
      _
    $region7: #{tpu_custom_call.1} parent=1 // pred_check_branch
      %25 = sbr.rel (0) target = $region9
    $region8: #{tpu_custom_call.1} parent=1 // pred_region
      _
    $region9: #{tpu_custom_call.1} parent=1 // pred_fallthru
      _
    // Predicated region
    $region10: #{tpu_custom_call.1} parent=1 // pred_check
      _
    $region11: #{tpu_custom_call.1} parent=1 // pred_check_branch
      %27 = sbr.rel (0) target = $region13
    $region12: #{tpu_custom_call.1} parent=1 // pred_region
      _
    $region13: #{tpu_custom_call.1} parent=1 // pred_fallthru
      _
    // Predicated region
    $region14: #{tpu_custom_call.1} parent=1 // pred_check
      _
    $region15: #{tpu_custom_call.1} parent=1 // pred_check_branch
      %29 = sbr.rel (0) target = $region17
    $region16: #{tpu_custom_call.1} parent=1 // pred_region
      %s31 = ssub.s32 4608, 4608
      %32 = vsyncadd [#allocation6], %s31
      %s33 = sshll.u32 [#allocation5], 4
      %s34 = int_to_ptr.vmem [resolvable:$true] %s33
      %39 = dma.hbm_to_vmem [thread:$0]  %s3, 4608, %s34, [#allocation6], 512, 512, 32
    $region17: #{tpu_custom_call.1} parent=1 // pred_fallthru
      _
    // Predicated region
    $region18: #{tpu_custom_call.1} parent=1 // pred_check
      _
    $region19: #{tpu_custom_call.1} parent=1 // pred_check_branch
      %41 = sbr.rel (0) target = $region21
    $region20: #{tpu_custom_call.1} parent=1 // pred_region
      _
    $region21: #{tpu_custom_call.1} parent=1 // pred_fallthru
      _
    // Predicated region
    $region22: #{tpu_custom_call.1} parent=1 // pred_check
      _
    $region23: #{tpu_custom_call.1} parent=1 // pred_check_branch
      %43 = sbr.rel (0) target = $region25
    $region24: #{tpu_custom_call.1} parent=1 // pred_region
      _
    $region25: #{tpu_custom_call.1} parent=1 // pred_fallthru
      _
    // Predicated region
    $region26: #{tpu_custom_call.1} parent=1 // pred_check
      _
    $region27: #{tpu_custom_call.1} parent=1 // pred_check_branch
      %45 = sbr.rel (0) target = $region29
    $region28: #{tpu_custom_call.1} parent=1 // pred_region
      %46 = dma.done [#allocation3], 512
    $region29: #{tpu_custom_call.1} parent=1 // pred_fallthru
      _
    // Predicated region
    $region30: #{tpu_custom_call.1} parent=1 // pred_check
      _
    $region31: #{tpu_custom_call.1} parent=1 // pred_check_branch
      %48 = sbr.rel (0) target = $region33
    $region32: #{tpu_custom_call.1} parent=1 // pred_region
      %49 = dma.done [#allocation6], 4608
    $region33: #{tpu_custom_call.1} parent=1 // pred_fallthru
      _
    %v50 = vld [vmem:[#allocation2] sm:$0xff]
    %v51 = vld [vmem:[#allocation2 + $0x8] sm:$0xff]
    %v52 = vld [vmem:[#allocation2 + $0x10] sm:$0xff]
    %v53 = vld [vmem:[#allocation2 + $0x18] sm:$0xff]
    %v54 = vld [vmem:[%s1] sm:$0xff]
    %v55 = vld [vmem:[%s2] sm:$0xff]
    %57 = vset.pattern.permute.xlu0 0
    %58 = vperm.xlu0 %57, %v55
    %v59 = vpop.permute.xlu0 %58
    %vm61 = vcmask 64512
    %v63 = vsel %vm61, %v54, 0
    %65 = vmatprep.subr.mxu0 0.0
    %66 = vmatpush1.msra.mxu0 0.0
    %67 = vmatprep.subr.mxu0 0.0
    %68 = vmatpush1.msra.mxu0 0.0
    %69 = vmatprep.subr.mxu0 0.0
    %70 = vmatpush1.msra.mxu0 0.0
    %71 = vmatprep.subr.mxu0 0.0
    %72 = vmatpush1.msra.mxu0 0.0
    %73 = vmatprep.subr.mxu0 0.0
    %74 = vmatpush1.msra.mxu0 0.0
    %75 = vmatprep.subr.mxu0 0.0
    %76 = vmatpush1.msra.mxu0 0.0
    %77 = vmatprep.subr.mxu0 0.0
    %78 = vmatpush1.msra.mxu0 0.0
    %79 = vmatprep.subr.mxu0 0.0
    %80 = vmatpush1.msra.mxu0 0.0
    %81 = vmatprep.subr.mxu0 0.0
    %82 = vmatpush1.msra.mxu0 0.0
    %83 = vmatprep.subr.mxu0 0.0
    %84 = vmatpush1.msra.mxu0 0.0
    %85 = vmatprep.subr.mxu0 0.0
    %86 = vmatpush1.msra.mxu0 0.0
    %87 = vmatprep.subr.mxu0 0.0
    %88 = vmatpush1.msra.mxu0 0.0
    %89 = vmatprep.subr.mxu0 0.0
    %90 = vmatpush1.msra.mxu0 0.0
    %91 = vmatprep.subr.mxu0 0.0
    %92 = vmatpush1.msra.mxu0 0.0
    %93 = vmatprep.subr.mxu0 0.0
    %94 = vmatpush1.msra.mxu0 0.0
    %95 = vmatprep.subr.mxu0 %v51
    %96 = vmatpush1.msra.mxu0 %v50
    %97 = vmatprep.subr.mxu0 0.0
    %98 = vmatpush2.msra.mxu0 0.0
    %99 = vmatprep.subr.mxu0 0.0
    %100 = vmatpush2.msra.mxu0 0.0
    %101 = vmatprep.subr.mxu0 0.0
    %102 = vmatpush2.msra.mxu0 0.0
    %103 = vmatprep.subr.mxu0 0.0
    %104 = vmatpush2.msra.mxu0 0.0
    %105 = vmatprep.subr.mxu0 0.0
    %106 = vmatpush2.msra.mxu0 0.0
    %107 = vmatprep.subr.mxu0 0.0
    %108 = vmatpush2.msra.mxu0 0.0
    %109 = vmatprep.subr.mxu0 0.0
    %110 = vmatpush2.msra.mxu0 0.0
    %111 = vmatprep.subr.mxu0 0.0
    %112 = vmatpush2.msra.mxu0 0.0
    %113 = vmatprep.subr.mxu0 0.0
    %114 = vmatpush2.msra.mxu0 0.0
    %115 = vmatprep.subr.mxu0 0.0
    %116 = vmatpush2.msra.mxu0 0.0
    %117 = vmatprep.subr.mxu0 0.0
    %118 = vmatpush2.msra.mxu0 0.0
    %119 = vmatprep.subr.mxu0 0.0
    %120 = vmatpush2.msra.mxu0 0.0
    %121 = vmatprep.subr.mxu0 0.0
    %122 = vmatpush2.msra.mxu0 0.0
    %123 = vmatprep.subr.mxu0 0.0
    %124 = vmatpush2.msra.mxu0 0.0
    %125 = vmatprep.subr.mxu0 0.0
    %126 = vmatpush2.msra.mxu0 0.0
    %127 = vmatprep.subr.mxu0 0.0
    %128 = vmatpush2.msra.mxu0 0.0
    %129 = vmatprep.mubr.f32.mxu0 0.0
    %130 = vmatmul.mubr.f32.gmra.mxu0 %v63
    %v131 = vpop.f32.mrf.mxu0
    %v132 = vadd.f32 %v59, %v131
    %v133 = vpop.f32.mrf.mxu0
    %v134 = vadd.f32 %v59, %v133
    %135 = vdwg.mxu0
    %136 = vmatprep.subr.mxu0 0.0
    %137 = vmatpush1.msra.mxu0 0.0
    %138 = vmatprep.subr.mxu0 0.0
    %139 = vmatpush1.msra.mxu0 0.0
    %140 = vmatprep.subr.mxu0 0.0
    %141 = vmatpush1.msra.mxu0 0.0
    %142 = vmatprep.subr.mxu0 0.0
    %143 = vmatpush1.msra.mxu0 0.0
    %144 = vmatprep.subr.mxu0 0.0
    %145 = vmatpush1.msra.mxu0 0.0
    %146 = vmatprep.subr.mxu0 0.0
    %147 = vmatpush1.msra.mxu0 0.0
    %148 = vmatprep.subr.mxu0 0.0
    %149 = vmatpush1.msra.mxu0 0.0
    %150 = vmatprep.subr.mxu0 0.0
    %151 = vmatpush1.msra.mxu0 0.0
    %152 = vmatprep.subr.mxu0 0.0
    %153 = vmatpush1.msra.mxu0 0.0
    %154 = vmatprep.subr.mxu0 0.0
    %155 = vmatpush1.msra.mxu0 0.0
    %156 = vmatprep.subr.mxu0 0.0
    %157 = vmatpush1.msra.mxu0 0.0
    %158 = vmatprep.subr.mxu0 0.0
    %159 = vmatpush1.msra.mxu0 0.0
    %160 = vmatprep.subr.mxu0 0.0
    %161 = vmatpush1.msra.mxu0 0.0
    %162 = vmatprep.subr.mxu0 0.0
    %163 = vmatpush1.msra.mxu0 0.0
    %164 = vmatprep.subr.mxu0 0.0
    %165 = vmatpush1.msra.mxu0 0.0
    %166 = vmatprep.subr.mxu0 %v53
    %167 = vmatpush1.msra.mxu0 %v52
    %168 = vmatprep.subr.mxu0 0.0
    %169 = vmatpush2.msra.mxu0 0.0
    %170 = vmatprep.subr.mxu0 0.0
    %171 = vmatpush2.msra.mxu0 0.0
    %172 = vmatprep.subr.mxu0 0.0
    %173 = vmatpush2.msra.mxu0 0.0
    %174 = vmatprep.subr.mxu0 0.0
    %175 = vmatpush2.msra.mxu0 0.0
    %176 = vmatprep.subr.mxu0 0.0
    %177 = vmatpush2.msra.mxu0 0.0
    %178 = vmatprep.subr.mxu0 0.0
    %179 = vmatpush2.msra.mxu0 0.0
    %180 = vmatprep.subr.mxu0 0.0
    %181 = vmatpush2.msra.mxu0 0.0
    %182 = vmatprep.subr.mxu0 0.0
    %183 = vmatpush2.msra.mxu0 0.0
    %184 = vmatprep.subr.mxu0 0.0
    %185 = vmatpush2.msra.mxu0 0.0
    %186 = vmatprep.subr.mxu0 0.0
    %187 = vmatpush2.msra.mxu0 0.0
    %188 = vmatprep.subr.mxu0 0.0
    %189 = vmatpush2.msra.mxu0 0.0
    %190 = vmatprep.subr.mxu0 0.0
    %191 = vmatpush2.msra.mxu0 0.0
    %192 = vmatprep.subr.mxu0 0.0
    %193 = vmatpush2.msra.mxu0 0.0
    %194 = vmatprep.subr.mxu0 0.0
    %195 = vmatpush2.msra.mxu0 0.0
    %196 = vmatprep.subr.mxu0 0.0
    %197 = vmatpush2.msra.mxu0 0.0
    %198 = vmatprep.subr.mxu0 0.0
    %199 = vmatpush2.msra.mxu0 0.0
    %200 = vmatprep.mubr.f32.mxu0 0.0
    %201 = vmatmul.mubr.f32.gmra.mxu0 %v63
    %v202 = vpop.f32.mrf.mxu0
    %v203 = vadd.f32 %v59, %v202
    %v204 = vpop.f32.mrf.mxu0
    %v205 = vadd.f32 %v59, %v204
    %206 = vdwg.mxu0
    %v207 = vmax.f32 %v132, 0.0
    %v208 = vmax.f32 %v134, 0.0
    %v209 = vmax.f32 %v203, 0.0
    %v210 = vmax.f32 %v205, 0.0
    %s211 = scalar_lea.vmem [#allocation5], 128
    %v212 = vld [vmem:[%s211] sm:$0xff]
    %v213 = vld [vmem:[%s211 + $0x8] sm:$0xff]
    %v214 = vld [vmem:[%s211 + $0x10] sm:$0xff]
    %v215 = vld [vmem:[%s211 + $0x18] sm:$0xff]
    %v216 = vmul.f32 %v207, %v212
    %v217 = vmul.f32 %v208, %v213
    %v218 = vmul.f32 %v209, %v214
    %v219 = vmul.f32 %v210, %v215
    %220 = vrot.lane.b32.xlu0 %v207, 17
    %v221 = vpop.permute.xlu0 %220
    %222 = vrot.lane.b32.xlu0 %v208, 17
    %v223 = vpop.permute.xlu0 %222
    %224 = vrot.lane.b32.xlu0 %v209, 17
    %v225 = vpop.permute.xlu0 %224
    %226 = vrot.lane.b32.xlu0 %v210, 17
    %v227 = vpop.permute.xlu0 %226
    %v228 = vlaneseq
    %v229 = vand.u32 %v228, 127
    %vm230 = vcmp.lt.s32.totalorder %v229, 17
    %v231 = vsel %vm230, %v225, %v227
    %v232 = vsel %vm230, %v223, %v225
    %v233 = vsel %vm230, %v221, %v223
    %v234 = vsel %vm230, %v227, %v221
    %v235 = vld [vmem:[#allocation5] sm:$0xff]
    %v236 = vld [vmem:[#allocation5 + $0x8] sm:$0xff]
    %v237 = vld [vmem:[#allocation5 + $0x10] sm:$0xff]
    %v238 = vld [vmem:[#allocation5 + $0x18] sm:$0xff]
    %v239 = vmul.f32 %v234, %v235
    %v240 = vmul.f32 %v233, %v236
    %v241 = vmul.f32 %v232, %v237
    %v242 = vmul.f32 %v231, %v238
    %v243 = vadd.f32 %v216, %v239
    %v244 = vadd.f32 %v217, %v240
    %v245 = vadd.f32 %v218, %v241
    %v246 = vadd.f32 %v219, %v242
    %247 = vrot.lane.b32.xlu0 %v207, 16
    %v248 = vpop.permute.xlu0 %247
    %249 = vrot.lane.b32.xlu0 %v208, 16
    %v250 = vpop.permute.xlu0 %249
    %251 = vrot.lane.b32.xlu0 %v209, 16
    %v252 = vpop.permute.xlu0 %251
    %253 = vrot.lane.b32.xlu0 %v210, 16
    %v254 = vpop.permute.xlu0 %253
    %vm255 = vcmp.lt.s32.totalorder %v229, 16
    %v256 = vsel %vm255, %v252, %v254
    %v257 = vsel %vm255, %v250, %v252
    %v258 = vsel %vm255, %v248, %v250
    %v259 = vsel %vm255, %v254, %v248
    %s260 = scalar_lea.vmem [#allocation5], 32
    %v261 = vld [vmem:[%s260] sm:$0xff]
    %v262 = vld [vmem:[%s260 + $0x8] sm:$0xff]
    %v263 = vld [vmem:[%s260 + $0x10] sm:$0xff]
    %v264 = vld [vmem:[%s260 + $0x18] sm:$0xff]
    %v265 = vmul.f32 %v259, %v261
    %v266 = vmul.f32 %v258, %v262
    %v267 = vmul.f32 %v257, %v263
    %v268 = vmul.f32 %v256, %v264
    %v269 = vadd.f32 %v243, %v265
    %v270 = vadd.f32 %v244, %v266
    %v271 = vadd.f32 %v245, %v267
    %v272 = vadd.f32 %v246, %v268
    %273 = vrot.lane.b32.xlu0 %v207, 15
    %v274 = vpop.permute.xlu0 %273
    %275 = vrot.lane.b32.xlu0 %v208, 15
    %v276 = vpop.permute.xlu0 %275
    %277 = vrot.lane.b32.xlu0 %v209, 15
    %v278 = vpop.permute.xlu0 %277
    %279 = vrot.lane.b32.xlu0 %v210, 15
    %v280 = vpop.permute.xlu0 %279
    %vm281 = vcmp.lt.s32.totalorder %v229, 15
    %v282 = vsel %vm281, %v278, %v280
    %v283 = vsel %vm281, %v276, %v278
    %v284 = vsel %vm281, %v274, %v276
    %v285 = vsel %vm281, %v280, %v274
    %s286 = scalar_lea.vmem [#allocation5], 64
    %v287 = vld [vmem:[%s286] sm:$0xff]
    %v288 = vld [vmem:[%s286 + $0x8] sm:$0xff]
    %v289 = vld [vmem:[%s286 + $0x10] sm:$0xff]
    %v290 = vld [vmem:[%s286 + $0x18] sm:$0xff]
    %v291 = vmul.f32 %v285, %v287
    %v292 = vmul.f32 %v284, %v288
    %v293 = vmul.f32 %v283, %v289
    %v294 = vmul.f32 %v282, %v290
    %v295 = vadd.f32 %v269, %v291
    %v296 = vadd.f32 %v270, %v292
    %v297 = vadd.f32 %v271, %v293
    %v298 = vadd.f32 %v272, %v294
    %299 = vrot.lane.b32.xlu0 %v207, 1
    %v300 = vpop.permute.xlu0 %299
    %301 = vrot.lane.b32.xlu0 %v208, 1
    %v302 = vpop.permute.xlu0 %301
    %303 = vrot.lane.b32.xlu0 %v209, 1
    %v304 = vpop.permute.xlu0 %303
    %305 = vrot.lane.b32.xlu0 %v210, 1
    %v306 = vpop.permute.xlu0 %305
    %vm307 = vcmp.lt.s32.totalorder %v229, 1
    %v308 = vsel %vm307, %v304, %v306
    %v309 = vsel %vm307, %v302, %v304
    %v310 = vsel %vm307, %v300, %v302
    %v311 = vsel %vm307, %v306, %v300
    %s312 = scalar_lea.vmem [#allocation5], 96
    %v313 = vld [vmem:[%s312] sm:$0xff]
    %v314 = vld [vmem:[%s312 + $0x8] sm:$0xff]
    %v315 = vld [vmem:[%s312 + $0x10] sm:$0xff]
    %v316 = vld [vmem:[%s312 + $0x18] sm:$0xff]
    %v317 = vmul.f32 %v311, %v313
    %v318 = vmul.f32 %v310, %v314
    %v319 = vmul.f32 %v309, %v315
    %v320 = vmul.f32 %v308, %v316
    %v321 = vadd.f32 %v295, %v317
    %v322 = vadd.f32 %v296, %v318
    %v323 = vadd.f32 %v297, %v319
    %v324 = vadd.f32 %v298, %v320
    %325 = vrot.lane.b32.xlu0 %v207, 127
    %v326 = vpop.permute.xlu0 %325
    %327 = vrot.lane.b32.xlu0 %v208, 127
    %v328 = vpop.permute.xlu0 %327
    %329 = vrot.lane.b32.xlu0 %v209, 127
    %v330 = vpop.permute.xlu0 %329
    %331 = vrot.lane.b32.xlu0 %v210, 127
    %v332 = vpop.permute.xlu0 %331
    %vm333 = vcmp.lt.s32.totalorder %v229, 127
    %v334 = vsel %vm333, %v330, %v332
    %v335 = vsel %vm333, %v328, %v330
    %v336 = vsel %vm333, %v326, %v328
    %v337 = vsel %vm333, %v332, %v326
    %s338 = scalar_lea.vmem [#allocation5], 160
    %v339 = vld [vmem:[%s338] sm:$0xff]
    %v340 = vld [vmem:[%s338 + $0x8] sm:$0xff]
    %v341 = vld [vmem:[%s338 + $0x10] sm:$0xff]
    %v342 = vld [vmem:[%s338 + $0x18] sm:$0xff]
    %v343 = vmul.f32 %v336, %v339
    %v344 = vmul.f32 %v335, %v340
    %v345 = vmul.f32 %v334, %v341
    %v346 = vmul.f32 %v337, %v342
    %v347 = vadd.f32 %v321, %v343
    %v348 = vadd.f32 %v322, %v344
    %v349 = vadd.f32 %v323, %v345
    %v350 = vadd.f32 %v324, %v346
    %351 = vrot.lane.b32.xlu0 %v207, 113
    %v352 = vpop.permute.xlu0 %351
    %353 = vrot.lane.b32.xlu0 %v208, 113
    %v354 = vpop.permute.xlu0 %353
    %355 = vrot.lane.b32.xlu0 %v209, 113
    %v356 = vpop.permute.xlu0 %355
    %357 = vrot.lane.b32.xlu0 %v210, 113
    %v358 = vpop.permute.xlu0 %357
    %vm359 = vcmp.lt.s32.totalorder %v229, 113
    %v360 = vsel %vm359, %v356, %v358
    %v361 = vsel %vm359, %v354, %v356
    %v362 = vsel %vm359, %v352, %v354
    %v363 = vsel %vm359, %v358, %v352
    %s364 = scalar_lea.vmem [#allocation5], 192
    %v365 = vld [vmem:[%s364] sm:$0xff]
    %v366 = vld [vmem:[%s364 + $0x8] sm:$0xff]
    %v367 = vld [vmem:[%s364 + $0x10] sm:$0xff]
    %v368 = vld [vmem:[%s364 + $0x18] sm:$0xff]
    %v369 = vmul.f32 %v362, %v365
    %v370 = vmul.f32 %v361, %v366
    %v371 = vmul.f32 %v360, %v367
    %v372 = vmul.f32 %v363, %v368
    %v373 = vadd.f32 %v347, %v369
    %v374 = vadd.f32 %v348, %v370
    %v375 = vadd.f32 %v349, %v371
    %v376 = vadd.f32 %v350, %v372
    %377 = vrot.lane.b32.xlu0 %v207, 112
    %v378 = vpop.permute.xlu0 %377
    %379 = vrot.lane.b32.xlu0 %v208, 112
    %v380 = vpop.permute.xlu0 %379
    %381 = vrot.lane.b32.xlu0 %v209, 112
    %v382 = vpop.permute.xlu0 %381
    %383 = vrot.lane.b32.xlu0 %v210, 112
    %v384 = vpop.permute.xlu0 %383
    %vm385 = vcmp.lt.s32.totalorder %v229, 112
    %v386 = vsel %vm385, %v382, %v384
    %v387 = vsel %vm385, %v380, %v382
    %v388 = vsel %vm385, %v378, %v380
    %v389 = vsel %vm385, %v384, %v378
    %s390 = scalar_lea.vmem [#allocation5], 224
    %v391 = vld [vmem:[%s390] sm:$0xff]
    %v392 = vld [vmem:[%s390 + $0x8] sm:$0xff]
    %v393 = vld [vmem:[%s390 + $0x10] sm:$0xff]
    %v394 = vld [vmem:[%s390 + $0x18] sm:$0xff]
    %v395 = vmul.f32 %v388, %v391
    %v396 = vmul.f32 %v387, %v392
    %v397 = vmul.f32 %v386, %v393
    %v398 = vmul.f32 %v389, %v394
    %v399 = vadd.f32 %v373, %v395
    %v400 = vadd.f32 %v374, %v396
    %v401 = vadd.f32 %v375, %v397
    %v402 = vadd.f32 %v376, %v398
    %403 = vrot.lane.b32.xlu0 %v207, 111
    %v404 = vpop.permute.xlu0 %403
    %405 = vrot.lane.b32.xlu0 %v208, 111
    %v406 = vpop.permute.xlu0 %405
    %407 = vrot.lane.b32.xlu0 %v209, 111
    %v408 = vpop.permute.xlu0 %407
    %409 = vrot.lane.b32.xlu0 %v210, 111
    %v410 = vpop.permute.xlu0 %409
    %vm411 = vcmp.lt.s32.totalorder %v229, 111
    %v412 = vsel %vm411, %v408, %v410
    %v413 = vsel %vm411, %v406, %v408
    %v414 = vsel %vm411, %v404, %v406
    %v415 = vsel %vm411, %v410, %v404
    %s416 = scalar_lea.vmem [#allocation5], 256
    %v417 = vld [vmem:[%s416] sm:$0xff]
    %v418 = vld [vmem:[%s416 + $0x8] sm:$0xff]
    %v419 = vld [vmem:[%s416 + $0x10] sm:$0xff]
    %v420 = vld [vmem:[%s416 + $0x18] sm:$0xff]
    %v421 = vmul.f32 %v414, %v417
    %v422 = vmul.f32 %v413, %v418
    %v423 = vmul.f32 %v412, %v419
    %v424 = vmul.f32 %v415, %v420
    %v425 = vadd.f32 %v399, %v421
    %v426 = vadd.f32 %v400, %v422
    %v427 = vadd.f32 %v401, %v423
    %v428 = vadd.f32 %v402, %v424
    %v429 = vld [vmem:[%s4] sm:$0xff]
    %v430 = vld [vmem:[%s5] sm:$0xff]
    %432 = vset.pattern.permute.xlu0 0
    %433 = vperm.xlu0 %432, %v430
    %v434 = vpop.permute.xlu0 %433
    %v437 = vsel %vm61, %v429, 0
    %439 = vmatprep.subr.mxu0 0.0
    %440 = vmatpush1.msra.mxu0 0.0
    %441 = vmatprep.subr.mxu0 0.0
    %442 = vmatpush1.msra.mxu0 0.0
    %443 = vmatprep.subr.mxu0 0.0
    %444 = vmatpush1.msra.mxu0 0.0
    %445 = vmatprep.subr.mxu0 0.0
    %446 = vmatpush1.msra.mxu0 0.0
    %447 = vmatprep.subr.mxu0 0.0
    %448 = vmatpush1.msra.mxu0 0.0
    %449 = vmatprep.subr.mxu0 0.0
    %450 = vmatpush1.msra.mxu0 0.0
    %451 = vmatprep.subr.mxu0 0.0
    %452 = vmatpush1.msra.mxu0 0.0
    %453 = vmatprep.subr.mxu0 0.0
    %454 = vmatpush1.msra.mxu0 0.0
    %455 = vmatprep.subr.mxu0 0.0
    %456 = vmatpush1.msra.mxu0 0.0
    %457 = vmatprep.subr.mxu0 0.0
    %458 = vmatpush1.msra.mxu0 0.0
    %459 = vmatprep.subr.mxu0 0.0
    %460 = vmatpush1.msra.mxu0 0.0
    %461 = vmatprep.subr.mxu0 0.0
    %462 = vmatpush1.msra.mxu0 0.0
    %463 = vmatprep.subr.mxu0 0.0
    %464 = vmatpush1.msra.mxu0 0.0
    %465 = vmatprep.subr.mxu0 0.0
    %466 = vmatpush1.msra.mxu0 0.0
    %467 = vmatprep.subr.mxu0 0.0
    %468 = vmatpush1.msra.mxu0 0.0
    %469 = vmatprep.subr.mxu0 %v426
    %470 = vmatpush1.msra.mxu0 %v425
    %471 = vmatprep.subr.mxu0 0.0
    %472 = vmatpush2.msra.mxu0 0.0
    %473 = vmatprep.subr.mxu0 0.0
    %474 = vmatpush2.msra.mxu0 0.0
    %475 = vmatprep.subr.mxu0 0.0
    %476 = vmatpush2.msra.mxu0 0.0
    %477 = vmatprep.subr.mxu0 0.0
    %478 = vmatpush2.msra.mxu0 0.0
    %479 = vmatprep.subr.mxu0 0.0
    %480 = vmatpush2.msra.mxu0 0.0
    %481 = vmatprep.subr.mxu0 0.0
    %482 = vmatpush2.msra.mxu0 0.0
    %483 = vmatprep.subr.mxu0 0.0
    %484 = vmatpush2.msra.mxu0 0.0
    %485 = vmatprep.subr.mxu0 0.0
    %486 = vmatpush2.msra.mxu0 0.0
    %487 = vmatprep.subr.mxu0 0.0
    %488 = vmatpush2.msra.mxu0 0.0
    %489 = vmatprep.subr.mxu0 0.0
    %490 = vmatpush2.msra.mxu0 0.0
    %491 = vmatprep.subr.mxu0 0.0
    %492 = vmatpush2.msra.mxu0 0.0
    %493 = vmatprep.subr.mxu0 0.0
    %494 = vmatpush2.msra.mxu0 0.0
    %495 = vmatprep.subr.mxu0 0.0
    %496 = vmatpush2.msra.mxu0 0.0
    %497 = vmatprep.subr.mxu0 0.0
    %498 = vmatpush2.msra.mxu0 0.0
    %499 = vmatprep.subr.mxu0 0.0
    %500 = vmatpush2.msra.mxu0 0.0
    %501 = vmatprep.subr.mxu0 0.0
    %502 = vmatpush2.msra.mxu0 0.0
    %503 = vmatprep.mubr.f32.mxu0 0.0
    %504 = vmatmul.mubr.f32.gmra.mxu0 %v437
    %v505 = vpop.f32.mrf.mxu0
    %v506 = vadd.f32 %v434, %v505
    %v507 = vpop.f32.mrf.mxu0
    %v508 = vadd.f32 %v434, %v507
    %509 = vdwg.mxu0
    %510 = vmatprep.subr.mxu0 0.0
    %511 = vmatpush1.msra.mxu0 0.0
    %512 = vmatprep.subr.mxu0 0.0
    %513 = vmatpush1.msra.mxu0 0.0
    %514 = vmatprep.subr.mxu0 0.0
    %515 = vmatpush1.msra.mxu0 0.0
    %516 = vmatprep.subr.mxu0 0.0
    %517 = vmatpush1.msra.mxu0 0.0
    %518 = vmatprep.subr.mxu0 0.0
    %519 = vmatpush1.msra.mxu0 0.0
    %520 = vmatprep.subr.mxu0 0.0
    %521 = vmatpush1.msra.mxu0 0.0
    %522 = vmatprep.subr.mxu0 0.0
    %523 = vmatpush1.msra.mxu0 0.0
    %524 = vmatprep.subr.mxu0 0.0
    %525 = vmatpush1.msra.mxu0 0.0
    %526 = vmatprep.subr.mxu0 0.0
    %527 = vmatpush1.msra.mxu0 0.0
    %528 = vmatprep.subr.mxu0 0.0
    %529 = vmatpush1.msra.mxu0 0.0
    %530 = vmatprep.subr.mxu0 0.0
    %531 = vmatpush1.msra.mxu0 0.0
    %532 = vmatprep.subr.mxu0 0.0
    %533 = vmatpush1.msra.mxu0 0.0
    %534 = vmatprep.subr.mxu0 0.0
    %535 = vmatpush1.msra.mxu0 0.0
    %536 = vmatprep.subr.mxu0 0.0
    %537 = vmatpush1.msra.mxu0 0.0
    %538 = vmatprep.subr.mxu0 0.0
    %539 = vmatpush1.msra.mxu0 0.0
    %540 = vmatprep.subr.mxu0 %v428
    %541 = vmatpush1.msra.mxu0 %v427
    %542 = vmatprep.subr.mxu0 0.0
    %543 = vmatpush2.msra.mxu0 0.0
    %544 = vmatprep.subr.mxu0 0.0
    %545 = vmatpush2.msra.mxu0 0.0
    %546 = vmatprep.subr.mxu0 0.0
    %547 = vmatpush2.msra.mxu0 0.0
    %548 = vmatprep.subr.mxu0 0.0
    %549 = vmatpush2.msra.mxu0 0.0
    %550 = vmatprep.subr.mxu0 0.0
    %551 = vmatpush2.msra.mxu0 0.0
    %552 = vmatprep.subr.mxu0 0.0
    %553 = vmatpush2.msra.mxu0 0.0
    %554 = vmatprep.subr.mxu0 0.0
    %555 = vmatpush2.msra.mxu0 0.0
    %556 = vmatprep.subr.mxu0 0.0
    %557 = vmatpush2.msra.mxu0 0.0
    %558 = vmatprep.subr.mxu0 0.0
    %559 = vmatpush2.msra.mxu0 0.0
    %560 = vmatprep.subr.mxu0 0.0
    %561 = vmatpush2.msra.mxu0 0.0
    %562 = vmatprep.subr.mxu0 0.0
    %563 = vmatpush2.msra.mxu0 0.0
    %564 = vmatprep.subr.mxu0 0.0
    %565 = vmatpush2.msra.mxu0 0.0
    %566 = vmatprep.subr.mxu0 0.0
    %567 = vmatpush2.msra.mxu0 0.0
    %568 = vmatprep.subr.mxu0 0.0
    %569 = vmatpush2.msra.mxu0 0.0
    %570 = vmatprep.subr.mxu0 0.0
    %571 = vmatpush2.msra.mxu0 0.0
    %572 = vmatprep.subr.mxu0 0.0
    %573 = vmatpush2.msra.mxu0 0.0
    %574 = vmatprep.mubr.f32.mxu0 0.0
    %575 = vmatmul.mubr.f32.gmra.mxu0 %v437
    %v576 = vpop.f32.mrf.mxu0
    %v577 = vadd.f32 %v434, %v576
    %v578 = vpop.f32.mrf.mxu0
    %v579 = vadd.f32 %v434, %v578
    %580 = vdwg.mxu0
    %v581 = vmax.f32 %v506, 0.0
    %v582 = vmax.f32 %v508, 0.0
    %v583 = vmax.f32 %v577, 0.0
    %v584 = vmax.f32 %v579, 0.0
    %v585 = vadd.f32 %v50, %v581
    %v586 = vadd.f32 %v51, %v582
    %v587 = vadd.f32 %v52, %v583
    %v588 = vadd.f32 %v53, %v584
    %589 = vst [vmem:[#allocation7] sm:$0xff] %v585
    %590 = vst [vmem:[#allocation7 + $0x8] sm:$0xff] %v586
    %591 = vst [vmem:[#allocation7 + $0x10] sm:$0xff] %v587
    %592 = vst [vmem:[#allocation7 + $0x18] sm:$0xff] %v588
    // Predicated region
    $region34: #{tpu_custom_call.1} parent=1 // pred_check
      _
    $region35: #{tpu_custom_call.1} parent=1 // pred_check_branch
      %594 = sbr.rel (0) target = $region37
    $region36: #{tpu_custom_call.1} parent=1 // pred_region
      %s596 = ssub.s32 512, 512
      %597 = vsyncadd [#allocation4], %s596
      %s599 = sshll.u32 [#allocation7], 4
      %s600 = int_to_ptr.vmem [resolvable:$true] %s599
      %602 = dma.vmem_to_hbm [thread:$0]  %s600, 512, %s6, [#allocation4]
    $region37: #{tpu_custom_call.1} parent=1 // pred_fallthru
      _
    // Predicated region
    $region38: #{tpu_custom_call.1} parent=1 // pred_check
      _
    $region39: #{tpu_custom_call.1} parent=1 // pred_check_branch
      %604 = sbr.rel (0) target = $region41
    $region40: #{tpu_custom_call.1} parent=1 // pred_region
      %605 = dma.done [#allocation4], 512
    $region41: #{tpu_custom_call.1} parent=1 // pred_fallthru
      _
    %606 = vsyncpa [#allocation3], 1
    %607 = vsyncpa [#allocation6], 1
    %608 = vsyncpa [#allocation4], 1

</llo_original>
